<compile_context>
chip_gen: v5e
topology: v5e:2x2
jax: 0.10.0
libtpu: 0.0.40
codegen_flags: <defaults>
</compile_context>

<pallas_src>
import functools

import jax
import jax.numpy as jnp
from jax.experimental import pallas as pl
from jax.experimental.pallas import tpu as pltpu


def _round_up(n: int, m: int) -> int:
    return ((n + m - 1) // m) * m


def _mlp_kernel(x_ref, w1_ref, b1_ref, w2_ref, b2_ref, o_ref):
    # Hidden layer: bf16 MXU matmul with f32 accumulation, bias+relu in f32.
    x_bf16 = x_ref[...].astype(jnp.bfloat16)
    h = jnp.dot(x_bf16, w1_ref[...], preferred_element_type=jnp.float32)
    h = jnp.maximum(h + b1_ref[...], 0.0)
    # Output layer: cast the activation back to bf16 for the second MXU pass.
    y = jnp.dot(h.astype(jnp.bfloat16), w2_ref[...],
                preferred_element_type=jnp.float32)
    y = y + b2_ref[...]
    o_ref[...] = y.astype(o_ref.dtype)


def prepare_params(w1, b1, w2, b2):
    """Pad weights/biases to lane-dense shapes and cast weights to bf16.

    Done ONCE (e.g. at init), so the per-call forward pass does no weight
    padding / casting traffic.

    w1: (F, H)   b1: (H,) or (1, H)   w2: (H, O)   b2: (O,) or (1, O)
    Returns (w1_p, b1_p, w2_p, b2_p) with shapes
      (F_p, H_p) bf16, (1, H_p) f32, (H_p, O_p) bf16, (1, O_p) f32.
    """
    F, H = w1.shape
    O = w2.shape[1]
    F_p, H_p, O_p = _round_up(F, 128), _round_up(H, 128), _round_up(O, 128)

    w1_p = jnp.zeros((F_p, H_p), jnp.bfloat16).at[:F, :H].set(
        w1.astype(jnp.bfloat16))
    b1_p = jnp.zeros((1, H_p), jnp.float32).at[:, :H].set(
        jnp.reshape(b1, (1, H)).astype(jnp.float32))
    w2_p = jnp.zeros((H_p, O_p), jnp.bfloat16).at[:H, :O].set(
        w2.astype(jnp.bfloat16))
    b2_p = jnp.zeros((1, O_p), jnp.float32).at[:, :O].set(
        jnp.reshape(b2, (1, O)).astype(jnp.float32))
    return w1_p, b1_p, w2_p, b2_p


def _pick_tile_and_vmem(B, F_p, H_p, O_p, block_b):
    """Generation-aware batch tile + VMEM limit (static Python ints only)."""
    try:
        vmem_cap = int(pltpu.get_tpu_info().vmem_capacity_bytes)
    except Exception:  # conservative default: v7x per-TensorCore VMEM
        vmem_cap = 64 * 1024 * 1024
    budget = int(vmem_cap * 0.75)  # headroom for Mosaic internal scratch

    # Resident weights/biases: bf16 weights, f32 biases, single-buffered
    # (pipeline_mode=pl.Buffered(1)).
    w_bytes = 2 * (F_p * H_p + H_p * O_p) + 4 * (H_p + O_p)

    def footprint(tb):
        stream = 2 * tb * F_p * 4 + 2 * tb * O_p * 4          # dbl-buffered x / out (f32)
        live = tb * (F_p + H_p) * 2 + tb * H_p * 4 + tb * O_p * 4  # bf16 casts + h + y
        return w_bytes + stream + live

    if block_b is not None:
        TB = max(8, _round_up(block_b, 8))
    else:
        # 128 MiB parts (v5e/v6e) can afford 1024-row tiles; 64 MiB (v7x) -> 512.
        TB = 1024 if vmem_cap >= 96 * 1024 * 1024 else 512
        while TB > 8 and footprint(TB) > budget:
            TB //= 2
    TB = min(TB, max(8, _round_up(B, 8)))  # never bigger than the (8-rounded) batch

    vmem_limit = max(16 * 1024 * 1024, int(footprint(TB) * 1.25))
    vmem_limit = min(vmem_limit, vmem_cap - 8 * 1024 * 1024)
    return TB, vmem_limit


@functools.partial(jax.jit, static_argnames=("n_output", "block_b"))
def net_forward(x, w1_p, b1_p, w2_p, b2_p, *, n_output, block_b=None):
    """Fused MLP forward pass in a single Pallas kernel.

    x     : (B, F) float32 (any float dtype accepted; cast to f32)
    w*_p  : pre-padded / pre-cast params from prepare_params()
    returns (B, n_output) float32
    """
    B, F = x.shape
    F_p, H_p = w1_p.shape
    O_p = w2_p.shape[1]

    x = x.astype(jnp.float32)
    if F != F_p:
        # Lane-pad the feature dim only; the batch dim is never padded.
        x = jnp.zeros((B, F_p), jnp.float32).at[:, :F].set(x)

    TB, vmem_limit = _pick_tile_and_vmem(B, F_p, H_p, O_p, block_b)
    grid = (pl.cdiv(B, TB),)

    cost = pl.CostEstimate(
        flops=2 * B * (F_p * H_p + H_p * O_p),
        transcendentals=0,
        bytes_accessed=(4 * B * F_p                       # x (f32)
                        + 2 * (F_p * H_p + H_p * O_p)     # bf16 weights
                        + 4 * (H_p + O_p)                 # f32 biases
                        + 4 * B * O_p),                   # output (f32)
    )

    resident = pl.Buffered(1)  # constant index_map -> no double buffering
    out_p = pl.pallas_call(
        _mlp_kernel,
        out_shape=jax.ShapeDtypeStruct((B, O_p), jnp.float32),
        grid=grid,
        in_specs=[
            pl.BlockSpec((TB, F_p), lambda i: (i, 0)),     # x: streamed over batch
            pl.BlockSpec((F_p, H_p), lambda i: (0, 0), pipeline_mode=resident),
            pl.BlockSpec((1, H_p), lambda i: (0, 0), pipeline_mode=resident),
            pl.BlockSpec((H_p, O_p), lambda i: (0, 0), pipeline_mode=resident),
            pl.BlockSpec((1, O_p), lambda i: (0, 0), pipeline_mode=resident),
        ],
        out_specs=pl.BlockSpec((TB, O_p), lambda i: (i, 0)),
        compiler_params=pltpu.CompilerParams(
            dimension_semantics=("parallel",),
            vmem_limit_bytes=int(vmem_limit),
        ),
        cost_estimate=cost,
    )(x, w1_p, b1_p, w2_p, b2_p)

    # Strip lane padding of the output features (batch was never padded).
    return out_p[:, :n_output]


def init_params(key, n_feature, n_hidden, n_output):
    """Deterministic init mimicking torch.nn.Linear (U(-1/sqrt(fan_in), +))."""
    k1, k2, k3, k4 = jax.random.split(key, 4)
    bound1 = 1.0 / jnp.sqrt(jnp.float32(n_feature))
    bound2 = 1.0 / jnp.sqrt(jnp.float32(n_hidden))
    w1 = jax.random.uniform(k1, (n_feature, n_hidden), jnp.float32, -bound1, bound1)
    b1 = jax.random.uniform(k2, (1, n_hidden), jnp.float32, -bound1, bound1)
    w2 = jax.random.uniform(k3, (n_hidden, n_output), jnp.float32, -bound2, bound2)
    b2 = jax.random.uniform(k4, (1, n_output), jnp.float32, -bound2, bound2)
    return w1, b1, w2, b2


def reference_forward(x, w1, b1, w2, b2):
    h = jnp.maximum(x @ w1 + b1, 0.0)
    return h @ w2 + b2


if __name__ == "__main__":
    key = jax.random.PRNGKey(0)

    # --- small shape consistent with the module (regression-style MLP).
    batch, n_feature, n_hidden, n_output = 8, 16, 32, 4
    kx, kp = jax.random.split(key)
    x = jax.random.normal(kx, (batch, n_feature), jnp.float32)
    w1, b1, w2, b2 = init_params(kp, n_feature, n_hidden, n_output)

    # One-time weight preparation (padding + bf16 cast) outside the fwd path.
    w1_p, b1_p, w2_p, b2_p = prepare_params(w1, b1, w2, b2)

    out = jax.block_until_ready(
        net_forward(x, w1_p, b1_p, w2_p, b2_p, n_output=n_output))
    ref = reference_forward(x, w1, b1, w2, b2)
    assert out.shape == (batch, n_output)
    # bf16 matmul inputs with f32 accumulation -> bf16-mantissa-level error.
    assert jnp.allclose(out, ref, atol=5e-2, rtol=5e-2), "mismatch vs reference"

    # --- second check: non-multiple batch -> ragged last tile, multi-step grid.
    batch2 = 200
    kx2, _ = jax.random.split(kx)
    x2 = jax.random.normal(kx2, (batch2, n_feature), jnp.float32)
    out2 = jax.block_until_ready(
        net_forward(x2, w1_p, b1_p, w2_p, b2_p, n_output=n_output, block_b=64))
    ref2 = reference_forward(x2, w1, b1, w2, b2)
    assert out2.shape == (batch2, n_output)
    assert jnp.allclose(out2, ref2, atol=5e-2, rtol=5e-2), \
        "mismatch vs reference (tiled)"

    print("KERNEL_OK")
</pallas_src>

<mosaic_0001>
module attributes {stable_mosaic.version = 11 : i64} {
  func.func @_mlp_kernel(%arg0: i32, %arg1: memref<8x128xf32, #tpu.memory_space<vmem>>, %arg2: memref<128x128xbf16, #tpu.memory_space<vmem>>, %arg3: memref<1x128xf32, #tpu.memory_space<vmem>>, %arg4: memref<128x128xbf16, #tpu.memory_space<vmem>>, %arg5: memref<1x128xf32, #tpu.memory_space<vmem>>, %arg6: memref<8x128xf32, #tpu.memory_space<vmem>>) attributes {dimension_semantics = [#tpu.dimension_semantics<parallel>], iteration_bounds = array<i64: 1>, scalar_prefetch = 0 : i64, scratch_operands = 0 : i64, tpu.core_type = #tpu.core_type<tc>, window_params = [{transform_indices = @transform_0, window_bounds = array<i64: 8, 128>}, {pipeline_mode = #tpu.pipeline_mode<synchronous>, transform_indices = @transform_1, window_bounds = array<i64: 128, 128>}, {pipeline_mode = #tpu.pipeline_mode<synchronous>, transform_indices = @transform_2, window_bounds = array<i64: 1, 128>}, {pipeline_mode = #tpu.pipeline_mode<synchronous>, transform_indices = @transform_3, window_bounds = array<i64: 128, 128>}, {pipeline_mode = #tpu.pipeline_mode<synchronous>, transform_indices = @transform_4, window_bounds = array<i64: 1, 128>}, {transform_indices = @transform_5, window_bounds = array<i64: 8, 128>}]} {
    %c0 = arith.constant 0 : index
    %c0_0 = arith.constant 0 : index
    %0 = vector.load %arg1[%c0, %c0_0] : memref<8x128xf32, #tpu.memory_space<vmem>>, vector<8x128xf32>
    %1 = arith.truncf %0 : vector<8x128xf32> to vector<8x128xbf16>
    %c0_1 = arith.constant 0 : index
    %c0_2 = arith.constant 0 : index
    %2 = vector.load %arg2[%c0_1, %c0_2] : memref<128x128xbf16, #tpu.memory_space<vmem>>, vector<128x128xbf16>
    %cst = arith.constant dense<0.000000e+00> : vector<8x128xf32>
    %3 = tpu.matmul %1, %2, %cst {dimension_numbers = #tpu.dot_dimension_numbers<[1], [0], [0], [1], [0, 0, 1, 1], [], []>} : vector<8x128xbf16>, vector<128x128xbf16>, vector<8x128xf32> -> vector<8x128xf32>
    %c0_3 = arith.constant 0 : index
    %c0_4 = arith.constant 0 : index
    %4 = vector.load %arg3[%c0_3, %c0_4] : memref<1x128xf32, #tpu.memory_space<vmem>>, vector<1x128xf32>
    %5 = vector.broadcast %4 : vector<1x128xf32> to vector<8x128xf32>
    %6 = arith.addf %3, %5 : vector<8x128xf32>
    %cst_5 = arith.constant 0.000000e+00 : f32
    %7 = vector.broadcast %cst_5 : f32 to vector<8x128xf32>
    %8 = arith.maximumf %6, %7 : vector<8x128xf32>
    %9 = arith.truncf %8 : vector<8x128xf32> to vector<8x128xbf16>
    %c0_6 = arith.constant 0 : index
    %c0_7 = arith.constant 0 : index
    %10 = vector.load %arg4[%c0_6, %c0_7] : memref<128x128xbf16, #tpu.memory_space<vmem>>, vector<128x128xbf16>
    %cst_8 = arith.constant dense<0.000000e+00> : vector<8x128xf32>
    %11 = tpu.matmul %9, %10, %cst_8 {dimension_numbers = #tpu.dot_dimension_numbers<[1], [0], [0], [1], [0, 0, 1, 1], [], []>} : vector<8x128xbf16>, vector<128x128xbf16>, vector<8x128xf32> -> vector<8x128xf32>
    %c0_9 = arith.constant 0 : index
    %c0_10 = arith.constant 0 : index
    %12 = vector.load %arg5[%c0_9, %c0_10] : memref<1x128xf32, #tpu.memory_space<vmem>>, vector<1x128xf32>
    %13 = vector.broadcast %12 : vector<1x128xf32> to vector<8x128xf32>
    %14 = arith.addf %11, %13 : vector<8x128xf32>
    %c0_11 = arith.constant 0 : index
    %c0_12 = arith.constant 0 : index
    %15 = vector.load %arg6[%c0_11, %c0_12] : memref<8x128xf32, #tpu.memory_space<vmem>>, vector<8x128xf32>
    tpu.vector_store %arg6[%c0_11, %c0_12], %14 {strides = array<i32>} : memref<8x128xf32, #tpu.memory_space<vmem>>, vector<8x128xf32>,
    return
  }
  func.func @transform_0(%arg0: i32) -> (i32, i32) {
    %c0_i32 = arith.constant 0 : i32
    %c0_i32_0 = arith.constant 0 : i32
    return %arg0, %c0_i32 : i32, i32
  }
  func.func @transform_1(%arg0: i32) -> (i32, i32) {
    %c0_i32 = arith.constant 0 : i32
    %c0_i32_0 = arith.constant 0 : i32
    %c0_i32_1 = arith.constant 0 : i32
    return %c0_i32, %c0_i32_0 : i32, i32
  }
  func.func @transform_2(%arg0: i32) -> (i32, i32) {
    %c0_i32 = arith.constant 0 : i32
    %c0_i32_0 = arith.constant 0 : i32
    %c0_i32_1 = arith.constant 0 : i32
    return %c0_i32, %c0_i32_0 : i32, i32
  }
  func.func @transform_3(%arg0: i32) -> (i32, i32) {
    %c0_i32 = arith.constant 0 : i32
    %c0_i32_0 = arith.constant 0 : i32
    %c0_i32_1 = arith.constant 0 : i32
    return %c0_i32, %c0_i32_0 : i32, i32
  }
  func.func @transform_4(%arg0: i32) -> (i32, i32) {
    %c0_i32 = arith.constant 0 : i32
    %c0_i32_0 = arith.constant 0 : i32
    %c0_i32_1 = arith.constant 0 : i32
    return %c0_i32, %c0_i32_0 : i32, i32
  }
  func.func @transform_5(%arg0: i32) -> (i32, i32) {
    %c0_i32 = arith.constant 0 : i32
    %c0_i32_0 = arith.constant 0 : i32
    return %arg0, %c0_i32 : i32, i32
  }
}

</mosaic_0001>

<llo_original>
// kernel: net_forward.1
$region0: #{net_forward.1}
  #allocation0 [shape = 'u32[]', space=smem, size = 0x4, offset = 0x4, fixed_abs, tag = 'smem constant byte address 0x4 - core index']
  #allocation1 [shape = 'u32[72,128]{1,0:T(1,128)}', space=vmem, size = 0x9000, scoped, tag = 'internal scratch']
  %s0 = inlined_call_operand.vmem [shape: f32[8,128], index: 0, kind: input, shape index: {}]
  %s1 = inlined_call_operand.hbm [shape: bf16[128,128], index: 1, kind: input, shape index: {}]
  %s2 = inlined_call_operand.vmem [shape: f32[1,128], index: 2, kind: input, shape index: {}]
  %s3 = inlined_call_operand.hbm [shape: bf16[128,128], index: 3, kind: input, shape index: {}]
  %s4 = inlined_call_operand.vmem [shape: f32[1,128], index: 4, kind: input, shape index: {}]
  %s5 = inlined_call_operand.vmem [shape: f32[8,128], index: 5, kind: output, shape index: {}]
  %s6 = sld [smem:[#allocation0]]
  $region38: #{net_forward.1} parent=0
    _
  %s8 = ssub.s32 1, %s6
  %s9 = scalar_select 0, %s8, %s6
  $region1: #{net_forward.1} parent=0
    #allocation2 [shape = 'u8[32768]{0}', space=vmem, size = 0x8000, scoped, tag = 'input window, operand 1, single buffered']
    #allocation3 [shape = 's32[1]{0}', space=sflag, size = 0x4, scoped, tag = 'scoped memory for net_forward.1']
    #allocation4 [shape = 'u8[32768]{0}', space=vmem, size = 0x8000, scoped, tag = 'input window, operand 3, single buffered']
    #allocation5 [shape = 's32[1]{0}', space=sflag, size = 0x4, scoped, tag = 'scoped memory for net_forward.1']
    %10 = vsyncpa [#allocation3], 0
    %11 = vsyncpa [#allocation5], 0
    // Predicated region
    $region2: #{net_forward.1} parent=1 // pred_check
      _
    $region3: #{net_forward.1} parent=1 // pred_check_branch
      %13 = sbr.rel (0) target = $region5
    $region4: #{net_forward.1} parent=1 // pred_region
      _
    $region5: #{net_forward.1} parent=1 // pred_fallthru
      _
    // Predicated region
    $region6: #{net_forward.1} parent=1 // pred_check
      _
    $region7: #{net_forward.1} parent=1 // pred_check_branch
      %15 = sbr.rel (0) target = $region9
    $region8: #{net_forward.1} parent=1 // pred_region
      %17 = vsyncadd [#allocation3], 0
      %s18 = sshll.u32 %s1, 4
      %s19 = int_to_ptr.hbm [resolvable:$true] %s18
      %s20 = sshll.u32 [#allocation2], 4
      %s21 = int_to_ptr.vmem [resolvable:$true] %s20
      %26 = dma.hbm_to_vmem [thread:$0]  %s19, 1024, %s21, [#allocation3], 64, 64, 4
    $region9: #{net_forward.1} parent=1 // pred_fallthru
      _
    // Predicated region
    $region10: #{net_forward.1} parent=1 // pred_check
      _
    $region11: #{net_forward.1} parent=1 // pred_check_branch
      %28 = sbr.rel (0) target = $region13
    $region12: #{net_forward.1} parent=1 // pred_region
      _
    $region13: #{net_forward.1} parent=1 // pred_fallthru
      _
    // Predicated region
    $region14: #{net_forward.1} parent=1 // pred_check
      _
    $region15: #{net_forward.1} parent=1 // pred_check_branch
      %30 = sbr.rel (0) target = $region17
    $region16: #{net_forward.1} parent=1 // pred_region
      %32 = vsyncadd [#allocation5], 0
      %s33 = sshll.u32 %s3, 4
      %s34 = int_to_ptr.hbm [resolvable:$true] %s33
      %s35 = sshll.u32 [#allocation4], 4
      %s36 = int_to_ptr.vmem [resolvable:$true] %s35
      %41 = dma.hbm_to_vmem [thread:$0]  %s34, 1024, %s36, [#allocation5], 64, 64, 4
    $region17: #{net_forward.1} parent=1 // pred_fallthru
      _
    // Predicated region
    $region18: #{net_forward.1} parent=1 // pred_check
      _
    $region19: #{net_forward.1} parent=1 // pred_check_branch
      %43 = sbr.rel (0) target = $region21
    $region20: #{net_forward.1} parent=1 // pred_region
      _
    $region21: #{net_forward.1} parent=1 // pred_fallthru
      _
    // Predicated region
    $region22: #{net_forward.1} parent=1 // pred_check
      _
    $region23: #{net_forward.1} parent=1 // pred_check_branch
      %45 = sbr.rel (0) target = $region25
    $region24: #{net_forward.1} parent=1 // pred_region
      %47 = dma.done [#allocation3], 1024
    $region25: #{net_forward.1} parent=1 // pred_fallthru
      _
    // Predicated region
    $region26: #{net_forward.1} parent=1 // pred_check
      _
    $region27: #{net_forward.1} parent=1 // pred_check_branch
      %49 = sbr.rel (0) target = $region29
    $region28: #{net_forward.1} parent=1 // pred_region
      %51 = dma.done [#allocation5], 1024
    $region29: #{net_forward.1} parent=1 // pred_fallthru
      _
    %v52 = vld [vmem:[%s0] sm:$0xff]
    %v53 = vpack.c.bf16 %v52, %v52
    %v54 = vld [vmem:[#allocation2] sm:$0xf]
    %v55 = vld [vmem:[#allocation2 + $0x4] sm:$0xf]
    %v56 = vld [vmem:[#allocation2 + $0x8] sm:$0xf]
    %v57 = vld [vmem:[#allocation2 + $0xc] sm:$0xf]
    %v58 = vld [vmem:[#allocation2 + $0x10] sm:$0xf]
    %v59 = vld [vmem:[#allocation2 + $0x14] sm:$0xf]
    %v60 = vld [vmem:[#allocation2 + $0x18] sm:$0xf]
    %v61 = vld [vmem:[#allocation2 + $0x1c] sm:$0xf]
    %v62 = vld [vmem:[#allocation2 + $0x20] sm:$0xf]
    %v63 = vld [vmem:[#allocation2 + $0x24] sm:$0xf]
    %v64 = vld [vmem:[#allocation2 + $0x28] sm:$0xf]
    %v65 = vld [vmem:[#allocation2 + $0x2c] sm:$0xf]
    %v66 = vld [vmem:[#allocation2 + $0x30] sm:$0xf]
    %v67 = vld [vmem:[#allocation2 + $0x34] sm:$0xf]
    %v68 = vld [vmem:[#allocation2 + $0x38] sm:$0xf]
    %v69 = vld [vmem:[#allocation2 + $0x3c] sm:$0xf]
    %v70 = vld [vmem:[%s2] sm:$0x1]
    %v72 = vperm.slane %v70, 0
    %v90 = vunpack.c.l.b16 %v54
    %v91 = vunpack.c.l.b16 %v55
    %v92 = vunpack.c.l.b16 %v56
    %v93 = vunpack.c.l.b16 %v57
    %v94 = vunpack.c.l.b16 %v58
    %v95 = vunpack.c.l.b16 %v59
    %v96 = vunpack.c.l.b16 %v60
    %v97 = vunpack.c.l.b16 %v61
    %v98 = vunpack.c.l.b16 %v62
    %v99 = vunpack.c.l.b16 %v63
    %v100 = vunpack.c.l.b16 %v64
    %v101 = vunpack.c.l.b16 %v65
    %v102 = vunpack.c.l.b16 %v66
    %v103 = vunpack.c.l.b16 %v67
    %v104 = vunpack.c.l.b16 %v68
    %v105 = vunpack.c.l.b16 %v69
    %v106 = vpack.c.b16 %v91, %v90
    %v107 = vpack.c.b16 %v93, %v92
    %v108 = vpack.c.b16 %v95, %v94
    %v109 = vpack.c.b16 %v97, %v96
    %v110 = vpack.c.b16 %v99, %v98
    %v111 = vpack.c.b16 %v101, %v100
    %v112 = vpack.c.b16 %v103, %v102
    %v113 = vpack.c.b16 %v105, %v104
    %122 = vmatpush.bf16.msra.mxu0 %v113
    %123 = vmatpush.bf16.msra.mxu0 %v112
    %124 = vmatpush.bf16.msra.mxu0 %v111
    %125 = vmatpush.bf16.msra.mxu0 %v110
    %126 = vmatpush.bf16.msra.mxu0 %v109
    %127 = vmatpush.bf16.msra.mxu0 %v108
    %128 = vmatpush.bf16.msra.mxu0 %v107
    %129 = vmatpush.bf16.msra.mxu0 %v106
    %130 = vmatmul.bf16.gmra.mxu0 %v53
    %v131 = vpop.f32.mrf.mxu0
    %v132 = vadd.f32 %v72, %v131
    %v133 = vpop.f32.mrf.mxu0
    %134 = vdwg.mxu0
    %v135 = vmax.f32 %v132, 0.0
    %v136 = vpack.c.bf16 %v135, %v135
    %v137 = vld [vmem:[#allocation4] sm:$0xf]
    %v138 = vld [vmem:[#allocation4 + $0x4] sm:$0xf]
    %v139 = vld [vmem:[#allocation4 + $0x8] sm:$0xf]
    %v140 = vld [vmem:[#allocation4 + $0xc] sm:$0xf]
    %v141 = vld [vmem:[#allocation4 + $0x10] sm:$0xf]
    %v142 = vld [vmem:[#allocation4 + $0x14] sm:$0xf]
    %v143 = vld [vmem:[#allocation4 + $0x18] sm:$0xf]
    %v144 = vld [vmem:[#allocation4 + $0x1c] sm:$0xf]
    %v145 = vld [vmem:[#allocation4 + $0x20] sm:$0xf]
    %v146 = vld [vmem:[#allocation4 + $0x24] sm:$0xf]
    %v147 = vld [vmem:[#allocation4 + $0x28] sm:$0xf]
    %v148 = vld [vmem:[#allocation4 + $0x2c] sm:$0xf]
    %v149 = vld [vmem:[#allocation4 + $0x30] sm:$0xf]
    %v150 = vld [vmem:[#allocation4 + $0x34] sm:$0xf]
    %v151 = vld [vmem:[#allocation4 + $0x38] sm:$0xf]
    %v152 = vld [vmem:[#allocation4 + $0x3c] sm:$0xf]
    %v153 = vld [vmem:[%s4] sm:$0x1]
    %v155 = vperm.slane %v153, 0
    %v173 = vunpack.c.l.b16 %v137
    %v174 = vunpack.c.l.b16 %v138
    %v175 = vunpack.c.l.b16 %v139
    %v176 = vunpack.c.l.b16 %v140
    %v177 = vunpack.c.l.b16 %v141
    %v178 = vunpack.c.l.b16 %v142
    %v179 = vunpack.c.l.b16 %v143
    %v180 = vunpack.c.l.b16 %v144
    %v181 = vunpack.c.l.b16 %v145
    %v182 = vunpack.c.l.b16 %v146
    %v183 = vunpack.c.l.b16 %v147
    %v184 = vunpack.c.l.b16 %v148
    %v185 = vunpack.c.l.b16 %v149
    %v186 = vunpack.c.l.b16 %v150
    %v187 = vunpack.c.l.b16 %v151
    %v188 = vunpack.c.l.b16 %v152
    %v189 = vpack.c.b16 %v174, %v173
    %v190 = vpack.c.b16 %v176, %v175
    %v191 = vpack.c.b16 %v178, %v177
    %v192 = vpack.c.b16 %v180, %v179
    %v193 = vpack.c.b16 %v182, %v181
    %v194 = vpack.c.b16 %v184, %v183
    %v195 = vpack.c.b16 %v186, %v185
    %v196 = vpack.c.b16 %v188, %v187
    %205 = vmatpush.bf16.msra.mxu0 %v196
    %206 = vmatpush.bf16.msra.mxu0 %v195
    %207 = vmatpush.bf16.msra.mxu0 %v194
    %208 = vmatpush.bf16.msra.mxu0 %v193
    %209 = vmatpush.bf16.msra.mxu0 %v192
    %210 = vmatpush.bf16.msra.mxu0 %v191
    %211 = vmatpush.bf16.msra.mxu0 %v190
    %212 = vmatpush.bf16.msra.mxu0 %v189
    %213 = vmatmul.bf16.gmra.mxu0 %v136
    %v214 = vpop.f32.mrf.mxu0
    %v215 = vadd.f32 %v155, %v214
    %v216 = vpop.f32.mrf.mxu0
    %217 = vdwg.mxu0
    %218 = vst [vmem:[%s5] sm:$0xff] %v215
    // Predicated region
    $region30: #{net_forward.1} parent=1 // pred_check
      _
    $region31: #{net_forward.1} parent=1 // pred_check_branch
      %220 = sbr.rel (0) target = $region33
    $region32: #{net_forward.1} parent=1 // pred_region
      _
    $region33: #{net_forward.1} parent=1 // pred_fallthru
      _
    // Predicated region
    $region34: #{net_forward.1} parent=1 // pred_check
      _
    $region35: #{net_forward.1} parent=1 // pred_check_branch
      %222 = sbr.rel (0) target = $region37
    $region36: #{net_forward.1} parent=1 // pred_region
      _
    $region37: #{net_forward.1} parent=1 // pred_fallthru
      _
    %223 = vsyncpa [#allocation3], 1
    %224 = vsyncpa [#allocation5], 1

</llo_original>
